<compile_context>
chip_gen: v7x
topology: tpu7x:2x2x1
jax: 0.10.0
libtpu: 0.0.40
codegen_flags: <defaults>
</compile_context>

<pallas_src>
import jax
import jax.numpy as jnp
from jax.experimental import pallas as pl
from jax.experimental.pallas import tpu as pltpu


_COMPILER_PARAMS = pltpu.CompilerParams(
    dimension_semantics=("parallel", "parallel"),   # B axis, H-tile axis
    vmem_limit_bytes=48 * 1024 * 1024,              # above 16/32 MiB defaults
)


def _pick_th(H, C, W, itemsize, n_tensors=4,
             budget_bytes=36 * 1024 * 1024, max_th=512):
    """Largest H tile (multiple of 8, divides H, <= max_th) whose
    double-buffered blocks for `n_tensors` (2,C,TH,W) arrays fit the budget."""
    if H % 8 != 0:
        return H                        # full-H block is always a legal shape
    row_bytes = 2 * C * W * itemsize    # one H-row of a (2, C, ., W) block
    best = 8
    th = 8
    while th <= min(H, max_th):
        if H % th == 0 and n_tensors * 2 * th * row_bytes <= budget_bytes:
            best = th
        th += 8
    return best


def _block_spec(C, th, W):
    # (B, 2, C, H, W) array -> (2, C, th, W) kernel block (batch dim squeezed).
    return pl.BlockSpec((None, 2, C, th, W), lambda bi, hi: (bi, 0, 0, hi, 0))


# ----------------------------- Pallas kernels ------------------------------

def _reduce_model_expand_kernel(w_ref, b_ref, img_ref, sens_ref, out_ref):
    # w_ref: SMEM (2,2); b_ref: SMEM (2,)
    # img_ref / sens_ref / out_ref: VMEM (2, C, TH, W)
    a_re = img_ref[0]                   # (C, TH, W)
    a_im = img_ref[1]
    s_re = sens_ref[0]
    s_im = sens_ref[1]

    # sens_reduce: sum_c complex_mul(img, conj(sens))   -> (TH, W)
    r_re = jnp.sum(a_re * s_re + a_im * s_im, axis=0)
    r_im = jnp.sum(a_im * s_re - a_re * s_im, axis=0)

    # stand-in regularizer: pointwise 1x1 complex-channel mixing
    m_re = w_ref[0, 0] * r_re + w_ref[0, 1] * r_im + b_ref[0]
    m_im = w_ref[1, 0] * r_re + w_ref[1, 1] * r_im + b_ref[1]

    # sens_expand (pre-FFT): complex_mul(m, sens) per coil; direct stores
    out_ref[0] = m_re[None] * s_re - m_im[None] * s_im
    out_ref[1] = m_re[None] * s_im + m_im[None] * s_re


def _combine_kernel(cur_ref, refk_ref, exp_ref, mdcw_ref, out_ref):
    # cur/refk/exp/out: (2, C, TH, W); mdcw_ref: (1, W) = mask * dc_weight
    mdcw = mdcw_ref[...][None, None]    # (1, 1, 1, W) broadcast over lanes
    cur = cur_ref[...]
    out_ref[...] = cur - (cur - refk_ref[...]) * mdcw - exp_ref[...]


# -------------------------- pallas_call wrappers ----------------------------

def _fused_reduce_model_expand(img, sens, w, b, th):
    B, _, C, H, W = img.shape
    spec = _block_spec(C, th, W)
    return pl.pallas_call(
        _reduce_model_expand_kernel,
        out_shape=jax.ShapeDtypeStruct((B, 2, C, H, W), img.dtype),
        grid=(B, H // th),
        in_specs=[pl.BlockSpec(memory_space=pltpu.MemorySpace.SMEM),
                  pl.BlockSpec(memory_space=pltpu.MemorySpace.SMEM),
                  spec, spec],
        out_specs=spec,
        compiler_params=_COMPILER_PARAMS,
    )(w, b, img, sens)


def _combine(cur, refk, exp, mdcw, th):
    B, _, C, H, W = cur.shape
    spec = _block_spec(C, th, W)
    return pl.pallas_call(
        _combine_kernel,
        out_shape=jax.ShapeDtypeStruct(cur.shape, cur.dtype),
        grid=(B, H // th),
        in_specs=[spec, spec, spec,
                  pl.BlockSpec((1, W), lambda bi, hi: (0, 0))],
        out_specs=spec,
        compiler_params=_COMPILER_PARAMS,
    )(cur, refk, exp, mdcw)


# --------------------------- FFT helpers (JAX) ------------------------------
# Centered orthonormal 2D FFT over (H, W), fastMRI T.fft2 / T.ifft2 semantics.
# TODO(synk): FFT has no clean Pallas equivalent; stays on the XLA FFT op.

def _fft2c(x):  # x: (B, 2, C, H, W) real
    c = x[:, 0] + 1j * x[:, 1]
    c = jnp.fft.ifftshift(c, axes=(-2, -1))
    c = jnp.fft.fft2(c, axes=(-2, -1), norm="ortho")
    c = jnp.fft.fftshift(c, axes=(-2, -1))
    return jnp.stack([jnp.real(c), jnp.imag(c)], axis=1).astype(x.dtype)


def _ifft2c(x):
    c = x[:, 0] + 1j * x[:, 1]
    c = jnp.fft.ifftshift(c, axes=(-2, -1))
    c = jnp.fft.ifft2(c, axes=(-2, -1), norm="ortho")
    c = jnp.fft.fftshift(c, axes=(-2, -1))
    return jnp.stack([jnp.real(c), jnp.imag(c)], axis=1).astype(x.dtype)


# ----------------------------- forward pass ---------------------------------

def varnet_block_packed(cur, refk, sens, mdcw, model_w, model_b):
    """Packed layout: cur/refk/sens: (B, 2, C, H, W); mdcw: (1, W).
    Use this inside a VarNet cascade (layout converted once outside)."""
    B, _, C, H, W = cur.shape
    th = _pick_th(H, C, W, cur.dtype.itemsize)

    img = _ifft2c(cur)                                         # (B,2,C,H,W)
    # fused: sens_reduce -> model -> sens_expand (pre-FFT)
    pre_fft = _fused_reduce_model_expand(img, sens, model_w, model_b, th)
    expanded = _fft2c(pre_fft)                                 # (B,2,C,H,W)
    # current - soft_dc(current) - expanded
    return _combine(cur, refk, expanded, mdcw, th)


@jax.jit
def varnet_block(current_kspace, ref_kspace, mask, sens_maps,
                 dc_weight, model_w, model_b):
    """current/ref/sens: (B, C, H, W, 2); mask: (W,) bool; dc_weight: (1,)."""
    to_packed = lambda x: jnp.transpose(x, (0, 4, 1, 2, 3))    # -> (B,2,C,H,W)
    from_packed = lambda x: jnp.transpose(x, (0, 2, 3, 4, 1))  # -> (B,C,H,W,2)

    cur = to_packed(current_kspace)
    refk = to_packed(ref_kspace)
    sens = to_packed(sens_maps)
    W = current_kspace.shape[3]
    # soft-DC weight as a per-lane vector: where(mask, ., 0) * dcw == (.)*mdcw
    mdcw = (mask.astype(current_kspace.dtype) * dc_weight[0]).reshape(1, W)

    out = varnet_block_packed(cur, refk, sens, mdcw, model_w, model_b)
    return from_packed(out)


# --------------------------- pure-JAX reference ------------------------------

def _reference(cur, refk, mask, sens, dcw, w, b):
    def c_mul(x, y):
        re = x[..., 0] * y[..., 0] - x[..., 1] * y[..., 1]
        im = x[..., 0] * y[..., 1] + x[..., 1] * y[..., 0]
        return jnp.stack([re, im], axis=-1)

    def c_conj(x):
        return jnp.stack([x[..., 0], -x[..., 1]], axis=-1)

    def fft2c(x):
        c = x[..., 0] + 1j * x[..., 1]
        c = jnp.fft.fftshift(jnp.fft.fft2(jnp.fft.ifftshift(c, axes=(-2, -1)),
                                          axes=(-2, -1), norm="ortho"),
                             axes=(-2, -1))
        return jnp.stack([c.real, c.imag], axis=-1).astype(x.dtype)

    def ifft2c(x):
        c = x[..., 0] + 1j * x[..., 1]
        c = jnp.fft.fftshift(jnp.fft.ifft2(jnp.fft.ifftshift(c, axes=(-2, -1)),
                                           axes=(-2, -1), norm="ortho"),
                             axes=(-2, -1))
        return jnp.stack([c.real, c.imag], axis=-1).astype(x.dtype)

    reduced = jnp.sum(c_mul(ifft2c(cur), c_conj(sens)), axis=1, keepdims=True)
    m_re = w[0, 0] * reduced[..., 0] + w[0, 1] * reduced[..., 1] + b[0]
    m_im = w[1, 0] * reduced[..., 0] + w[1, 1] * reduced[..., 1] + b[1]
    model_out = jnp.stack([m_re, m_im], axis=-1)
    expanded = fft2c(c_mul(model_out, sens))
    soft_dc = jnp.where(mask[None, None, None, :, None], cur - refk, 0.0) * dcw[0]
    return cur - soft_dc - expanded


if __name__ == "__main__":
    key = jax.random.PRNGKey(0)
    B, C, H, W = 2, 4, 16, 128     # W = 128 keeps the lane dim dense
    k1, k2, k3 = jax.random.split(key, 3)
    current_kspace = jax.random.normal(k1, (B, C, H, W, 2), jnp.float32)
    ref_kspace = jax.random.normal(k2, (B, C, H, W, 2), jnp.float32)
    sens_maps = jax.random.normal(k3, (B, C, H, W, 2), jnp.float32)
    # Cartesian undersampling mask over the phase-encode (W) dimension,
    # broadcast like the (1,1,1,W,1) bool mask in fastMRI.
    mask = (jnp.arange(W) % 2 == 0)

    # nn.Parameter(torch.ones(1))
    dc_weight = jnp.ones((1,), jnp.float32)

    # TODO(synk): the external regularizer `model` (e.g. NormUnet) is replaced
    # by a deterministic pointwise 1x1 complex-channel mixing layer with the
    # same (B,1,H,W,2)->(B,1,H,W,2) I/O; weights fixed in-script.
    model_w = jnp.array([[1.1, -0.2], [0.3, 0.9]], jnp.float32)
    model_b = jnp.array([0.05, -0.05], jnp.float32)

    out = varnet_block(current_kspace, ref_kspace, mask, sens_maps,
                       dc_weight, model_w, model_b)
    jax.block_until_ready(out)
    assert out.shape == current_kspace.shape and out.dtype == jnp.float32

    ref = _reference(current_kspace, ref_kspace, mask, sens_maps,
                     dc_weight, model_w, model_b)
    assert jnp.allclose(out, ref, rtol=1e-3, atol=1e-3)
    print("KERNEL_OK")
</pallas_src>

<mosaic_0001>
module attributes {stable_mosaic.version = 11 : i64} {
  func.func @_reduce_model_expand_kernel(%arg0: i32, %arg1: i32, %arg2: memref<2x2xf32, #tpu.memory_space<smem>>, %arg3: memref<2xf32, #tpu.memory_space<smem>>, %arg4: memref<1x2x4x16x128xf32, #tpu.memory_space<vmem>>, %arg5: memref<1x2x4x16x128xf32, #tpu.memory_space<vmem>>, %arg6: memref<1x2x4x16x128xf32, #tpu.memory_space<vmem>>) attributes {dimension_semantics = [#tpu.dimension_semantics<parallel>, #tpu.dimension_semantics<parallel>], iteration_bounds = array<i64: 2, 1>, scalar_prefetch = 0 : i64, scratch_operands = 0 : i64, tpu.core_type = #tpu.core_type<tc>, window_params = [{transform_indices = @transform_0, window_bounds = array<i64: 2, 2>}, {transform_indices = @transform_1, window_bounds = array<i64: 2>}, {transform_indices = @transform_2, window_bounds = array<i64: 1, 2, 4, 16, 128>}, {transform_indices = @transform_3, window_bounds = array<i64: 1, 2, 4, 16, 128>}, {transform_indices = @transform_4, window_bounds = array<i64: 1, 2, 4, 16, 128>}]} {
    %c0 = arith.constant 0 : index
    %c0_0 = arith.constant 0 : index
    %c0_1 = arith.constant 0 : index
    %c0_2 = arith.constant 0 : index
    %c0_3 = arith.constant 0 : index
    %0 = vector.load %arg4[%c0, %c0_0, %c0_1, %c0_2, %c0_3] : memref<1x2x4x16x128xf32, #tpu.memory_space<vmem>>, vector<1x1x4x16x128xf32>
    %1 = vector.shape_cast %0 : vector<1x1x4x16x128xf32> to vector<4x16x128xf32>
    %c0_4 = arith.constant 0 : index
    %c1 = arith.constant 1 : index
    %c0_5 = arith.constant 0 : index
    %c0_6 = arith.constant 0 : index
    %c0_7 = arith.constant 0 : index
    %2 = vector.load %arg4[%c0_4, %c1, %c0_5, %c0_6, %c0_7] : memref<1x2x4x16x128xf32, #tpu.memory_space<vmem>>, vector<1x1x4x16x128xf32>
    %3 = vector.shape_cast %2 : vector<1x1x4x16x128xf32> to vector<4x16x128xf32>
    %c0_8 = arith.constant 0 : index
    %c0_9 = arith.constant 0 : index
    %c0_10 = arith.constant 0 : index
    %c0_11 = arith.constant 0 : index
    %c0_12 = arith.constant 0 : index
    %4 = vector.load %arg5[%c0_8, %c0_9, %c0_10, %c0_11, %c0_12] : memref<1x2x4x16x128xf32, #tpu.memory_space<vmem>>, vector<1x1x4x16x128xf32>
    %5 = vector.shape_cast %4 : vector<1x1x4x16x128xf32> to vector<4x16x128xf32>
    %c0_13 = arith.constant 0 : index
    %c1_14 = arith.constant 1 : index
    %c0_15 = arith.constant 0 : index
    %c0_16 = arith.constant 0 : index
    %c0_17 = arith.constant 0 : index
    %6 = vector.load %arg5[%c0_13, %c1_14, %c0_15, %c0_16, %c0_17] : memref<1x2x4x16x128xf32, #tpu.memory_space<vmem>>, vector<1x1x4x16x128xf32>
    %7 = vector.shape_cast %6 : vector<1x1x4x16x128xf32> to vector<4x16x128xf32>
    %8 = arith.mulf %1, %5 : vector<4x16x128xf32>
    %9 = arith.mulf %3, %7 : vector<4x16x128xf32>
    %10 = arith.addf %8, %9 : vector<4x16x128xf32>
    %cst = arith.constant dense<0.000000e+00> : vector<16x128xf32>
    %11 = vector.multi_reduction <add>, %10, %cst [0] : vector<4x16x128xf32> to vector<16x128xf32>
    %12 = arith.mulf %3, %5 : vector<4x16x128xf32>
    %13 = arith.mulf %1, %7 : vector<4x16x128xf32>
    %14 = arith.subf %12, %13 : vector<4x16x128xf32>
    %cst_18 = arith.constant dense<0.000000e+00> : vector<16x128xf32>
    %15 = vector.multi_reduction <add>, %14, %cst_18 [0] : vector<4x16x128xf32> to vector<16x128xf32>
    %c0_19 = arith.constant 0 : index
    %c0_20 = arith.constant 0 : index
    %16 = memref.load %arg2[%c0_19, %c0_20] : memref<2x2xf32, #tpu.memory_space<smem>>
    %17 = vector.broadcast %16 : f32 to vector<16x128xf32>
    %18 = arith.mulf %17, %11 : vector<16x128xf32>
    %c0_21 = arith.constant 0 : index
    %c1_22 = arith.constant 1 : index
    %19 = memref.load %arg2[%c0_21, %c1_22] : memref<2x2xf32, #tpu.memory_space<smem>>
    %20 = vector.broadcast %19 : f32 to vector<16x128xf32>
    %21 = arith.mulf %20, %15 : vector<16x128xf32>
    %22 = arith.addf %18, %21 : vector<16x128xf32>
    %c0_23 = arith.constant 0 : index
    %23 = memref.load %arg3[%c0_23] : memref<2xf32, #tpu.memory_space<smem>>
    %24 = vector.broadcast %23 : f32 to vector<16x128xf32>
    %25 = arith.addf %22, %24 : vector<16x128xf32>
    %c1_24 = arith.constant 1 : index
    %c0_25 = arith.constant 0 : index
    %26 = memref.load %arg2[%c1_24, %c0_25] : memref<2x2xf32, #tpu.memory_space<smem>>
    %27 = vector.broadcast %26 : f32 to vector<16x128xf32>
    %28 = arith.mulf %27, %11 : vector<16x128xf32>
    %c1_26 = arith.constant 1 : index
    %c1_27 = arith.constant 1 : index
    %29 = memref.load %arg2[%c1_26, %c1_27] : memref<2x2xf32, #tpu.memory_space<smem>>
    %30 = vector.broadcast %29 : f32 to vector<16x128xf32>
    %31 = arith.mulf %30, %15 : vector<16x128xf32>
    %32 = arith.addf %28, %31 : vector<16x128xf32>
    %c1_28 = arith.constant 1 : index
    %33 = memref.load %arg3[%c1_28] : memref<2xf32, #tpu.memory_space<smem>>
    %34 = vector.broadcast %33 : f32 to vector<16x128xf32>
    %35 = arith.addf %32, %34 : vector<16x128xf32>
    %36 = vector.shape_cast %25 : vector<16x128xf32> to vector<1x16x128xf32>
    %37 = vector.broadcast %36 : vector<1x16x128xf32> to vector<4x16x128xf32>
    %38 = arith.mulf %37, %5 : vector<4x16x128xf32>
    %39 = vector.shape_cast %35 : vector<16x128xf32> to vector<1x16x128xf32>
    %40 = vector.broadcast %39 : vector<1x16x128xf32> to vector<4x16x128xf32>
    %41 = arith.mulf %40, %7 : vector<4x16x128xf32>
    %42 = arith.subf %38, %41 : vector<4x16x128xf32>
    %c0_29 = arith.constant 0 : index
    %c0_30 = arith.constant 0 : index
    %c0_31 = arith.constant 0 : index
    %c0_32 = arith.constant 0 : index
    %c0_33 = arith.constant 0 : index
    %43 = vector.load %arg6[%c0_29, %c0_30, %c0_31, %c0_32, %c0_33] : memref<1x2x4x16x128xf32, #tpu.memory_space<vmem>>, vector<1x1x4x16x128xf32>
    %44 = vector.shape_cast %43 : vector<1x1x4x16x128xf32> to vector<4x16x128xf32>
    %45 = vector.shape_cast %42 : vector<4x16x128xf32> to vector<1x1x4x16x128xf32>
    tpu.vector_store %arg6[%c0_29, %c0_30, %c0_31, %c0_32, %c0_33], %45 {strides = array<i32>} : memref<1x2x4x16x128xf32, #tpu.memory_space<vmem>>, vector<1x1x4x16x128xf32>,
    %46 = vector.shape_cast %25 : vector<16x128xf32> to vector<1x16x128xf32>
    %47 = vector.broadcast %46 : vector<1x16x128xf32> to vector<4x16x128xf32>
    %48 = arith.mulf %47, %7 : vector<4x16x128xf32>
    %49 = vector.shape_cast %35 : vector<16x128xf32> to vector<1x16x128xf32>
    %50 = vector.broadcast %49 : vector<1x16x128xf32> to vector<4x16x128xf32>
    %51 = arith.mulf %50, %5 : vector<4x16x128xf32>
    %52 = arith.addf %48, %51 : vector<4x16x128xf32>
    %c0_34 = arith.constant 0 : index
    %c1_35 = arith.constant 1 : index
    %c0_36 = arith.constant 0 : index
    %c0_37 = arith.constant 0 : index
    %c0_38 = arith.constant 0 : index
    %53 = vector.load %arg6[%c0_34, %c1_35, %c0_36, %c0_37, %c0_38] : memref<1x2x4x16x128xf32, #tpu.memory_space<vmem>>, vector<1x1x4x16x128xf32>
    %54 = vector.shape_cast %53 : vector<1x1x4x16x128xf32> to vector<4x16x128xf32>
    %55 = vector.shape_cast %52 : vector<4x16x128xf32> to vector<1x1x4x16x128xf32>
    tpu.vector_store %arg6[%c0_34, %c1_35, %c0_36, %c0_37, %c0_38], %55 {strides = array<i32>} : memref<1x2x4x16x128xf32, #tpu.memory_space<vmem>>, vector<1x1x4x16x128xf32>,
    return
  }
  func.func @transform_0(%arg0: i32, %arg1: i32) -> (i32, i32) {
    %c0_i32 = arith.constant 0 : i32
    %c0_i32_0 = arith.constant 0 : i32
    %c0_i32_1 = arith.constant 0 : i32
    return %c0_i32, %c0_i32_0 : i32, i32
  }
  func.func @transform_1(%arg0: i32, %arg1: i32) -> i32 {
    %c0_i32 = arith.constant 0 : i32
    %c0_i32_0 = arith.constant 0 : i32
    return %c0_i32 : i32
  }
  func.func @transform_2(%arg0: i32, %arg1: i32) -> (i32, i32, i32, i32, i32) {
    %c0_i32 = arith.constant 0 : i32
    %c0_i32_0 = arith.constant 0 : i32
    %c0_i32_1 = arith.constant 0 : i32
    %c0_i32_2 = arith.constant 0 : i32
    return %arg0, %c0_i32, %c0_i32_0, %arg1, %c0_i32_1 : i32, i32, i32, i32, i32
  }
  func.func @transform_3(%arg0: i32, %arg1: i32) -> (i32, i32, i32, i32, i32) {
    %c0_i32 = arith.constant 0 : i32
    %c0_i32_0 = arith.constant 0 : i32
    %c0_i32_1 = arith.constant 0 : i32
    %c0_i32_2 = arith.constant 0 : i32
    return %arg0, %c0_i32, %c0_i32_0, %arg1, %c0_i32_1 : i32, i32, i32, i32, i32
  }
  func.func @transform_4(%arg0: i32, %arg1: i32) -> (i32, i32, i32, i32, i32) {
    %c0_i32 = arith.constant 0 : i32
    %c0_i32_0 = arith.constant 0 : i32
    %c0_i32_1 = arith.constant 0 : i32
    %c0_i32_2 = arith.constant 0 : i32
    return %arg0, %c0_i32, %c0_i32_0, %arg1, %c0_i32_1 : i32, i32, i32, i32, i32
  }
}

module attributes {stable_mosaic.version = 11 : i64} {
  func.func @_combine_kernel(%arg0: i32, %arg1: i32, %arg2: memref<1x2x4x16x128xf32, #tpu.memory_space<vmem>>, %arg3: memref<1x2x4x16x128xf32, #tpu.memory_space<vmem>>, %arg4: memref<1x2x4x16x128xf32, #tpu.memory_space<vmem>>, %arg5: memref<1x128xf32, #tpu.memory_space<vmem>>, %arg6: memref<1x2x4x16x128xf32, #tpu.memory_space<vmem>>) attributes {dimension_semantics = [#tpu.dimension_semantics<parallel>, #tpu.dimension_semantics<parallel>], iteration_bounds = array<i64: 2, 1>, scalar_prefetch = 0 : i64, scratch_operands = 0 : i64, tpu.core_type = #tpu.core_type<tc>, window_params = [{transform_indices = @transform_0, window_bounds = array<i64: 1, 2, 4, 16, 128>}, {transform_indices = @transform_1, window_bounds = array<i64: 1, 2, 4, 16, 128>}, {transform_indices = @transform_2, window_bounds = array<i64: 1, 2, 4, 16, 128>}, {pipeline_mode = #tpu.pipeline_mode<synchronous>, transform_indices = @transform_3, window_bounds = array<i64: 1, 128>}, {transform_indices = @transform_4, window_bounds = array<i64: 1, 2, 4, 16, 128>}]} {
    %c0 = arith.constant 0 : index
    %c0_0 = arith.constant 0 : index
    %0 = vector.load %arg5[%c0, %c0_0] : memref<1x128xf32, #tpu.memory_space<vmem>>, vector<1x128xf32>
    %1 = vector.shape_cast %0 : vector<1x128xf32> to vector<1x1x1x128xf32>
    %c0_1 = arith.constant 0 : index
    %c0_2 = arith.constant 0 : index
    %c0_3 = arith.constant 0 : index
    %c0_4 = arith.constant 0 : index
    %c0_5 = arith.constant 0 : index
    %2 = vector.load %arg2[%c0_1, %c0_2, %c0_3, %c0_4, %c0_5] : memref<1x2x4x16x128xf32, #tpu.memory_space<vmem>>, vector<1x2x4x16x128xf32>
    %3 = vector.shape_cast %2 : vector<1x2x4x16x128xf32> to vector<2x4x16x128xf32>
    %c0_6 = arith.constant 0 : index
    %c0_7 = arith.constant 0 : index
    %c0_8 = arith.constant 0 : index
    %c0_9 = arith.constant 0 : index
    %c0_10 = arith.constant 0 : index
    %4 = vector.load %arg3[%c0_6, %c0_7, %c0_8, %c0_9, %c0_10] : memref<1x2x4x16x128xf32, #tpu.memory_space<vmem>>, vector<1x2x4x16x128xf32>
    %5 = vector.shape_cast %4 : vector<1x2x4x16x128xf32> to vector<2x4x16x128xf32>
    %6 = arith.subf %3, %5 : vector<2x4x16x128xf32>
    %7 = vector.broadcast %1 : vector<1x1x1x128xf32> to vector<2x4x16x128xf32>
    %8 = arith.mulf %6, %7 : vector<2x4x16x128xf32>
    %9 = arith.subf %3, %8 : vector<2x4x16x128xf32>
    %c0_11 = arith.constant 0 : index
    %c0_12 = arith.constant 0 : index
    %c0_13 = arith.constant 0 : index
    %c0_14 = arith.constant 0 : index
    %c0_15 = arith.constant 0 : index
    %10 = vector.load %arg4[%c0_11, %c0_12, %c0_13, %c0_14, %c0_15] : memref<1x2x4x16x128xf32, #tpu.memory_space<vmem>>, vector<1x2x4x16x128xf32>
    %11 = vector.shape_cast %10 : vector<1x2x4x16x128xf32> to vector<2x4x16x128xf32>
    %12 = arith.subf %9, %11 : vector<2x4x16x128xf32>
    %c0_16 = arith.constant 0 : index
    %c0_17 = arith.constant 0 : index
    %c0_18 = arith.constant 0 : index
    %c0_19 = arith.constant 0 : index
    %c0_20 = arith.constant 0 : index
    %13 = vector.load %arg6[%c0_16, %c0_17, %c0_18, %c0_19, %c0_20] : memref<1x2x4x16x128xf32, #tpu.memory_space<vmem>>, vector<1x2x4x16x128xf32>
    %14 = vector.shape_cast %13 : vector<1x2x4x16x128xf32> to vector<2x4x16x128xf32>
    %15 = vector.shape_cast %12 : vector<2x4x16x128xf32> to vector<1x2x4x16x128xf32>
    tpu.vector_store %arg6[%c0_16, %c0_17, %c0_18, %c0_19, %c0_20], %15 {strides = array<i32>} : memref<1x2x4x16x128xf32, #tpu.memory_space<vmem>>, vector<1x2x4x16x128xf32>,
    return
  }
  func.func @transform_0(%arg0: i32, %arg1: i32) -> (i32, i32, i32, i32, i32) {
    %c0_i32 = arith.constant 0 : i32
    %c0_i32_0 = arith.constant 0 : i32
    %c0_i32_1 = arith.constant 0 : i32
    %c0_i32_2 = arith.constant 0 : i32
    return %arg0, %c0_i32, %c0_i32_0, %arg1, %c0_i32_1 : i32, i32, i32, i32, i32
  }
  func.func @transform_1(%arg0: i32, %arg1: i32) -> (i32, i32, i32, i32, i32) {
    %c0_i32 = arith.constant 0 : i32
    %c0_i32_0 = arith.constant 0 : i32
    %c0_i32_1 = arith.constant 0 : i32
    %c0_i32_2 = arith.constant 0 : i32
    return %arg0, %c0_i32, %c0_i32_0, %arg1, %c0_i32_1 : i32, i32, i32, i32, i32
  }
  func.func @transform_2(%arg0: i32, %arg1: i32) -> (i32, i32, i32, i32, i32) {
    %c0_i32 = arith.constant 0 : i32
    %c0_i32_0 = arith.constant 0 : i32
    %c0_i32_1 = arith.constant 0 : i32
    %c0_i32_2 = arith.constant 0 : i32
    return %arg0, %c0_i32, %c0_i32_0, %arg1, %c0_i32_1 : i32, i32, i32, i32, i32
  }
  func.func @transform_3(%arg0: i32, %arg1: i32) -> (i32, i32) {
    %c0_i32 = arith.constant 0 : i32
    %c0_i32_0 = arith.constant 0 : i32
    %c0_i32_1 = arith.constant 0 : i32
    return %c0_i32, %c0_i32_0 : i32, i32
  }
  func.func @transform_4(%arg0: i32, %arg1: i32) -> (i32, i32, i32, i32, i32) {
    %c0_i32 = arith.constant 0 : i32
    %c0_i32_0 = arith.constant 0 : i32
    %c0_i32_1 = arith.constant 0 : i32
    %c0_i32_2 = arith.constant 0 : i32
    return %arg0, %c0_i32, %c0_i32_0, %arg1, %c0_i32_1 : i32, i32, i32, i32, i32
  }
}

</mosaic_0001>

<llo_original>
// kernel: varnet_block.2
$region0: #{varnet_block.2}
  #allocation0 [shape = 'u32[]', space=smem, size = 0x4, offset = 0x4, fixed_abs, tag = 'smem constant byte address 0x4 - core index']
  #allocation1 [shape = 'u32[144,128]{1,0:T(1,128)}', space=vmem, size = 0x12000, scoped, tag = 'internal scratch']
  %s0 = inlined_call_operand.vmem [shape: f32[2,2], index: 0, kind: input, shape index: {}]
  %s1 = inlined_call_operand.vmem [shape: f32[2], index: 1, kind: input, shape index: {}]
  %s2 = inlined_call_operand.vmem [shape: f32[2,2,4,16,128], index: 2, kind: input, shape index: {}]
  %s3 = inlined_call_operand.vmem [shape: f32[2,2,4,16,128], index: 3, kind: input, shape index: {}]
  %s4 = inlined_call_operand.vmem [shape: f32[2,2,4,16,128], index: 4, kind: output, shape index: {}]
  %s5 = sld [smem:[#allocation0]]
  $region57: #{varnet_block.2} parent=0
    _
  %s7 = ssub.s32 1, %s5
  %s8 = scalar_select 0, %s7, %s5
  $region1: #{varnet_block.2} parent=0
    #allocation2 [shape = 'u8[1024]{0}', space=smem, size = 0x400, scoped, tag = 'input window, operand 0, single buffered']
    #allocation3 [shape = 's32[2]{0}', space=sflag, size = 0x8, scoped, tag = 'scoped memory for varnet_block.2']
    #allocation4 [shape = 'u8[512]{0}', space=smem, size = 0x200, scoped, tag = 'input window, operand 1, single buffered']
    #allocation5 [shape = 's32[1]{0}', space=sflag, size = 0x4, scoped, tag = 'scoped memory for varnet_block.2']
    %9 = vsyncpa [#allocation3], 0
    %10 = vsyncpa [#allocation5], 0
    loop: start=0, step=1, limit=4
    $region2: #{varnet_block.2} parent=1 // loop_pre_header
      _
    $region3: #{varnet_block.2} parent=1 // loop_header
      %s12 = sphi 0, %s16
      %p13 = scmp.ge.s32.totalorder %s12, 4
      %s19 = sphi 0, %s31
      %s20 = sphi 0, %s27
      %s21 = sphi 0, %s19
      %s22 = sphi 0, %s20
      %s23 = sphi 0, %s21
      %s24 = sphi 0, %s22
      %s32 = sphi 0, %s32
      %s34 = sphi 0, %s32
      %s35 = sphi 0, %s34
      %s49 = sphi 0, %s35
      %s53 = sphi 0, %s53
      %s55 = sphi 0, %s53
      %s56 = sphi 0, %s55
      %s70 = sphi 0, %s56
      %s78 = sphi 0, %s80
      %s81 = sphi 0, %s78
      %s82 = sphi 0, %s81
      %s98 = sphi 0, %s82
      %s106 = sphi 0, %s108
      %s109 = sphi 0, %s106
      %s110 = sphi 0, %s109
      %s126 = sphi 0, %s110
      %s134 = sphi 0, %s136
      %s137 = sphi 0, %s134
      %s138 = sphi 0, %s137
      %s154 = sphi 0, %s138
    $region4: #{varnet_block.2} parent=1 // loop_header_branch
      %15 = sbr.rel (%p13) target = $region8
    $region5: #{varnet_block.2} parent=1 // loop_body
      %s17 = ssub.s32 %s12, 1
      %s18 = ssub.s32 %s12, 2
      %s25 = sadd.s32 1, %s20
      %p26 = scmp.ge.s32.totalorder %s25, 1
      %s27 = scalar_select %p26, 0, %s25
      %s28 = sadd.s32 1, %s19
      %s29 = scalar_select %p26, %s28, %s19
      %p30 = scmp.ge.s32.totalorder %s29, 2
      %s31 = scalar_select %p30, 0, %s29
      %s33 = sadd.s32 %s32, 1
      %p36 = scmp.eq.s32.totalorder %s12, 1
      %p37 = scmp.ne.s32.totalorder %s32, %s34
      %p38 = scmp.eq.s32.totalorder %s12, 0
      %p39 = por %p37, %p38
      %p40 = scmp.ne.s32.totalorder %s32, %s34
      %p41 = scmp.eq.s32.totalorder %s17, 1
      %p42 = por %p40, %p41
      %p43 = scmp.ne.s32.totalorder %s34, %s35
      %p44 = scmp.eq.s32.totalorder %s17, 0
      %p45 = por %p43, %p44
      %p46 = scmp.ne.s32.totalorder %s34, %s35
      %p47 = scmp.eq.s32.totalorder %s18, 1
      %p48 = por %p46, %p47
      %p50 = scmp.ne.s32.totalorder %s35, %s49
      %p51 = scmp.eq.s32.totalorder %s18, 0
      %p52 = por %p50, %p51
      %s54 = sadd.s32 %s53, 1
      %p57 = scmp.eq.s32.totalorder %s12, 1
      %p58 = scmp.ne.s32.totalorder %s53, %s55
      %p59 = scmp.eq.s32.totalorder %s12, 0
      %p60 = por %p58, %p59
      %p61 = scmp.ne.s32.totalorder %s53, %s55
      %p62 = scmp.eq.s32.totalorder %s17, 1
      %p63 = por %p61, %p62
      %p64 = scmp.ne.s32.totalorder %s55, %s56
      %p65 = scmp.eq.s32.totalorder %s17, 0
      %p66 = por %p64, %p65
      %p67 = scmp.ne.s32.totalorder %s55, %s56
      %p68 = scmp.eq.s32.totalorder %s18, 1
      %p69 = por %p67, %p68
      %p71 = scmp.ne.s32.totalorder %s56, %s70
      %p72 = scmp.eq.s32.totalorder %s18, 0
      %p73 = por %p71, %p72
      %s74 = ssub.s32 %s19, %s31
      %s75 = ssub.s32 %s20, %s27
      %s76 = sor.u32 %s74, %s75
      %p77 = scmp.eq.s32.totalorder %s76, 0
      %s79 = sadd.s32 %s78, 1
      %s80 = scalar_select %p77, %s78, %s79
      %p83 = pneg %p77
      %p84 = scmp.eq.s32.totalorder %s12, 1
      %p85 = por %p83, %p84
      %p86 = scmp.ne.s32.totalorder %s78, %s81
      %p87 = scmp.eq.s32.totalorder %s12, 0
      %p88 = por %p86, %p87
      %p89 = scmp.ne.s32.totalorder %s78, %s81
      %p90 = scmp.eq.s32.totalorder %s17, 1
      %p91 = por %p89, %p90
      %p92 = scmp.ne.s32.totalorder %s81, %s82
      %p93 = scmp.eq.s32.totalorder %s17, 0
      %p94 = por %p92, %p93
      %p95 = scmp.ne.s32.totalorder %s81, %s82
      %p96 = scmp.eq.s32.totalorder %s18, 1
      %p97 = por %p95, %p96
      %p99 = scmp.ne.s32.totalorder %s82, %s98
      %p100 = scmp.eq.s32.totalorder %s18, 0
      %p101 = por %p99, %p100
      %s102 = ssub.s32 %s19, %s31
      %s103 = ssub.s32 %s20, %s27
      %s104 = sor.u32 %s102, %s103
      %p105 = scmp.eq.s32.totalorder %s104, 0
      %s107 = sadd.s32 %s106, 1
      %s108 = scalar_select %p105, %s106, %s107
      %p111 = pneg %p105
      %p112 = scmp.eq.s32.totalorder %s12, 1
      %p113 = por %p111, %p112
      %p114 = scmp.ne.s32.totalorder %s106, %s109
      %p115 = scmp.eq.s32.totalorder %s12, 0
      %p116 = por %p114, %p115
      %p117 = scmp.ne.s32.totalorder %s106, %s109
      %p118 = scmp.eq.s32.totalorder %s17, 1
      %p119 = por %p117, %p118
      %p120 = scmp.ne.s32.totalorder %s109, %s110
      %p121 = scmp.eq.s32.totalorder %s17, 0
      %p122 = por %p120, %p121
      %p123 = scmp.ne.s32.totalorder %s109, %s110
      %p124 = scmp.eq.s32.totalorder %s18, 1
      %p125 = por %p123, %p124
      %p127 = scmp.ne.s32.totalorder %s110, %s126
      %p128 = scmp.eq.s32.totalorder %s18, 0
      %p129 = por %p127, %p128
      %s130 = ssub.s32 %s19, %s31
      %s131 = ssub.s32 %s20, %s27
      %s132 = sor.u32 %s130, %s131
      %p133 = scmp.eq.s32.totalorder %s132, 0
      %s135 = sadd.s32 %s134, 1
      %s136 = scalar_select %p133, %s134, %s135
      %p139 = pneg %p133
      %p140 = scmp.eq.s32.totalorder %s12, 1
      %p141 = por %p139, %p140
      %p142 = scmp.ne.s32.totalorder %s134, %s137
      %p143 = scmp.eq.s32.totalorder %s12, 0
      %p144 = por %p142, %p143
      %p145 = scmp.ne.s32.totalorder %s134, %s137
      %p146 = scmp.eq.s32.totalorder %s17, 1
      %p147 = por %p145, %p146
      %p148 = scmp.ne.s32.totalorder %s137, %s138
      %p149 = scmp.eq.s32.totalorder %s17, 0
      %p150 = por %p148, %p149
      %p151 = scmp.ne.s32.totalorder %s137, %s138
      %p152 = scmp.eq.s32.totalorder %s18, 1
      %p153 = por %p151, %p152
      %p155 = scmp.ne.s32.totalorder %s138, %s154
      %p156 = scmp.eq.s32.totalorder %s18, 0
      %p157 = por %p155, %p156
      %p158 = scmp.le.s32.totalorder 1, %s12
      %p159 = scmp.lt.s32.totalorder %s12, 3
      %p160 = pnand %p158, %p159
      %p161 = pneg %p160
      // Predicated region
      $region9: #{varnet_block.2} parent=5 // pred_check
        _
      $region10: #{varnet_block.2} parent=5 // pred_check_branch
        %163 = sbr.rel (%p160) target = $region12
      $region11: #{varnet_block.2} parent=5 // pred_region
        %s164 = ssub.s32 %s12, 1
        // Predicated region
        $region13: #{varnet_block.2} parent=11 // pred_check
          %p165 = pneg %p45
        $region14: #{varnet_block.2} parent=11 // pred_check_branch
          %167 = sbr.rel (%p165) target = $region16
        $region15: #{varnet_block.2} parent=11 // pred_region
          %s169 = ssub.s32 32, 32
          %170 = vsyncadd [#allocation3], %s169
          %s172 = sshll.u32 %s0, 4
          %s173 = int_to_ptr.vmem [resolvable:$true] %s172
          %175 = dma.vmem_to_smem %s173, 32, [#allocation2], [#allocation3]
        $region16: #{varnet_block.2} parent=11 // pred_fallthru
          _
        // Predicated region
        $region17: #{varnet_block.2} parent=11 // pred_check
          %p176 = pneg %p66
        $region18: #{varnet_block.2} parent=11 // pred_check_branch
          %178 = sbr.rel (%p176) target = $region20
        $region19: #{varnet_block.2} parent=11 // pred_region
          %s180 = ssub.s32 16, 16
          %181 = vsyncadd [#allocation5], %s180
          %s183 = sshll.u32 %s1, 4
          %s184 = int_to_ptr.vmem [resolvable:$true] %s183
          %186 = dma.vmem_to_smem %s184, 16, [#allocation4], [#allocation5]
        $region20: #{varnet_block.2} parent=11 // pred_fallthru
          _
      $region12: #{varnet_block.2} parent=5 // pred_fallthru
        _
      %p187 = scmp.lt.s32.totalorder %s12, 2
      // Predicated region
      $region21: #{varnet_block.2} parent=5 // pred_check
        %p188 = pneg %p187
      $region22: #{varnet_block.2} parent=5 // pred_check_branch
        %190 = sbr.rel (%p188) target = $region24
      $region23: #{varnet_block.2} parent=5 // pred_region
        // Predicated region
        $region25: #{varnet_block.2} parent=23 // pred_check
          %p191 = pneg %p88
        $region26: #{varnet_block.2} parent=23 // pred_check_branch
          %193 = sbr.rel (%p191) target = $region28
        $region27: #{varnet_block.2} parent=23 // pred_region
          %s194 = smul.u32 2, %s20
          %p195 = scmp.lt.s32.totalorder %s19, 1
          %s196 = scalar_select %p195, %s19, 1
          %p197 = scmp.lt.s32.totalorder %s194, 1
          %s198 = scalar_select %p197, %s194, 1
          %s199 = smul.addr %s196, 16
          %s200 = sadd.s32 %s198, %s199
          %s201 = smul.addr %s200, 8
          %s202 = scalar_lea.vmem %s2, %s201
          %s203 = smul.u32 2, %s20
        $region28: #{varnet_block.2} parent=23 // pred_fallthru
          _
        // Predicated region
        $region29: #{varnet_block.2} parent=23 // pred_check
          %p204 = pneg %p116
        $region30: #{varnet_block.2} parent=23 // pred_check_branch
          %206 = sbr.rel (%p204) target = $region32
        $region31: #{varnet_block.2} parent=23 // pred_region
          %s207 = smul.u32 2, %s20
          %p208 = scmp.lt.s32.totalorder %s19, 1
          %s209 = scalar_select %p208, %s19, 1
          %p210 = scmp.lt.s32.totalorder %s207, 1
          %s211 = scalar_select %p210, %s207, 1
          %s212 = smul.addr %s209, 16
          %s213 = sadd.s32 %s211, %s212
          %s214 = smul.addr %s213, 8
          %s215 = scalar_lea.vmem %s3, %s214
          %s216 = smul.u32 2, %s20
        $region32: #{varnet_block.2} parent=23 // pred_fallthru
          _
      $region24: #{varnet_block.2} parent=5 // pred_fallthru
        _
      %p217 = scmp.le.s32.totalorder 1, %s12
      %p218 = scmp.lt.s32.totalorder %s12, 3
      %p219 = pnand %p217, %p218
      %p220 = pneg %p219
      // Predicated region
      $region33: #{varnet_block.2} parent=5 // pred_check
        _
      $region34: #{varnet_block.2} parent=5 // pred_check_branch
        %222 = sbr.rel (%p219) target = $region36
      $region35: #{varnet_block.2} parent=5 // pred_region
        %s223 = ssub.s32 %s12, 1
        // Predicated region
        $region37: #{varnet_block.2} parent=35 // pred_check
          %p224 = pneg %p45
        $region38: #{varnet_block.2} parent=35 // pred_check_branch
          %226 = sbr.rel (%p224) target = $region40
        $region39: #{varnet_block.2} parent=35 // pred_region
          %227 = dma.done [#allocation3], 32
        $region40: #{varnet_block.2} parent=35 // pred_fallthru
          _
        // Predicated region
        $region41: #{varnet_block.2} parent=35 // pred_check
          %p228 = pneg %p66
        $region42: #{varnet_block.2} parent=35 // pred_check_branch
          %230 = sbr.rel (%p228) target = $region44
        $region43: #{varnet_block.2} parent=35 // pred_region
          %231 = dma.done [#allocation5], 16
        $region44: #{varnet_block.2} parent=35 // pred_fallthru
          _
        %232 = sfence
        %p233 = pneg %p45
        %p234 = pneg %p42
        %p235 = pneg %p66
        %p236 = pneg %p63
        %s237 = smul.u32 2, %s22
        %p238 = scmp.lt.s32.totalorder %s21, 1
        %s239 = scalar_select %p238, %s21, 1
        %p240 = scmp.lt.s32.totalorder %s237, 1
        %s241 = scalar_select %p240, %s237, 1
        %s242 = smul.addr %s239, 16
        %s243 = sadd.s32 %s241, %s242
        %s244 = smul.addr %s243, 8
        %s245 = scalar_lea.vmem %s2, %s244
        %p246 = pneg %p94
        %p247 = pneg %p91
        %s248 = smul.u32 2, %s22
        %p249 = scmp.lt.s32.totalorder %s21, 1
        %s250 = scalar_select %p249, %s21, 1
        %p251 = scmp.lt.s32.totalorder %s248, 1
        %s252 = scalar_select %p251, %s248, 1
        %s253 = smul.addr %s250, 16
        %s254 = sadd.s32 %s252, %s253
        %s255 = smul.addr %s254, 8
        %s256 = scalar_lea.vmem %s3, %s255
        %p257 = pneg %p122
        %p258 = pneg %p119
        %p259 = pneg %p150
        %p260 = pneg %p147
        %s261 = smul.u32 2, %s22
        %p262 = scmp.lt.s32.totalorder %s21, 1
        %s263 = scalar_select %p262, %s21, 1
        %p264 = scmp.lt.s32.totalorder %s261, 1
        %s265 = scalar_select %p264, %s261, 1
        %s266 = smul.addr %s263, 16
        %s267 = sadd.s32 %s265, %s266
        %s268 = smul.addr %s267, 8
        %s269 = scalar_lea.vmem %s4, %s268
        %s270 = smul.u32 2, %s22
        %p271 = scmp.lt.s32.totalorder %s21, 1
        %s272 = scalar_select %p271, %s21, 1
        %p273 = scmp.lt.s32.totalorder %s270, 1
        %s274 = scalar_select %p273, %s270, 1
        %s275 = smul.addr %s272, 16
        %s276 = sadd.s32 %s274, %s275
        %s277 = smul.addr %s276, 8
        %s278 = scalar_lea.vmem %s2, %s277
        %s279 = smul.u32 2, %s22
        %s280 = smul.u32 2, %s22
        %p281 = scmp.lt.s32.totalorder %s21, 1
        %s282 = scalar_select %p281, %s21, 1
        %p283 = scmp.lt.s32.totalorder %s280, 1
        %s284 = scalar_select %p283, %s280, 1
        %s285 = smul.addr %s282, 16
        %s286 = sadd.s32 %s284, %s285
        %s287 = smul.addr %s286, 8
        %s288 = scalar_lea.vmem %s3, %s287
        %s289 = smul.u32 2, %s22
        %s290 = smul.u32 2, %s22
        %p291 = scmp.lt.s32.totalorder %s21, 1
        %s292 = scalar_select %p291, %s21, 1
        %p293 = scmp.lt.s32.totalorder %s290, 1
        %s294 = scalar_select %p293, %s290, 1
        %s295 = smul.addr %s292, 16
        %s296 = sadd.s32 %s294, %s295
        %s297 = smul.addr %s296, 8
        %s298 = scalar_lea.vmem %s4, %s297
        %s299 = smul.u32 2, %s22
        %v300 = vld [vmem:[%s278] sm:$0xff]
        %v301 = vld [vmem:[%s278 + $0x8] sm:$0xff]
        %v302 = vld [vmem:[%s278 + $0x10] sm:$0xff]
        %v303 = vld [vmem:[%s278 + $0x18] sm:$0xff]
        %v304 = vld [vmem:[%s278 + $0x20] sm:$0xff]
        %v305 = vld [vmem:[%s278 + $0x28] sm:$0xff]
        %v306 = vld [vmem:[%s278 + $0x30] sm:$0xff]
        %v307 = vld [vmem:[%s278 + $0x38] sm:$0xff]
        %s308 = scalar_lea.vmem %s278, 64
        %v309 = vld [vmem:[%s308] sm:$0xff]
        %v310 = vld [vmem:[%s308 + $0x8] sm:$0xff]
        %v311 = vld [vmem:[%s308 + $0x10] sm:$0xff]
        %v312 = vld [vmem:[%s308 + $0x18] sm:$0xff]
        %v313 = vld [vmem:[%s308 + $0x20] sm:$0xff]
        %v314 = vld [vmem:[%s308 + $0x28] sm:$0xff]
        %v315 = vld [vmem:[%s308 + $0x30] sm:$0xff]
        %v316 = vld [vmem:[%s308 + $0x38] sm:$0xff]
        %v317 = vld [vmem:[%s288] sm:$0xff]
        %v318 = vld [vmem:[%s288 + $0x8] sm:$0xff]
        %v319 = vld [vmem:[%s288 + $0x10] sm:$0xff]
        %v320 = vld [vmem:[%s288 + $0x18] sm:$0xff]
        %v321 = vld [vmem:[%s288 + $0x20] sm:$0xff]
        %v322 = vld [vmem:[%s288 + $0x28] sm:$0xff]
        %v323 = vld [vmem:[%s288 + $0x30] sm:$0xff]
        %v324 = vld [vmem:[%s288 + $0x38] sm:$0xff]
        %s325 = scalar_lea.vmem %s288, 64
        %v326 = vld [vmem:[%s325] sm:$0xff]
        %v327 = vld [vmem:[%s325 + $0x8] sm:$0xff]
        %v328 = vld [vmem:[%s325 + $0x10] sm:$0xff]
        %v329 = vld [vmem:[%s325 + $0x18] sm:$0xff]
        %v330 = vld [vmem:[%s325 + $0x20] sm:$0xff]
        %v331 = vld [vmem:[%s325 + $0x28] sm:$0xff]
        %v332 = vld [vmem:[%s325 + $0x30] sm:$0xff]
        %v333 = vld [vmem:[%s325 + $0x38] sm:$0xff]
        %v334 = vmul.f32 %v300, %v317
        %v335 = vmul.f32 %v301, %v318
        %v336 = vmul.f32 %v302, %v319
        %v337 = vmul.f32 %v303, %v320
        %v338 = vmul.f32 %v304, %v321
        %v339 = vmul.f32 %v305, %v322
        %v340 = vmul.f32 %v306, %v323
        %v341 = vmul.f32 %v307, %v324
        %v342 = vmul.f32 %v309, %v326
        %v343 = vmul.f32 %v310, %v327
        %v344 = vmul.f32 %v311, %v328
        %v345 = vmul.f32 %v312, %v329
        %v346 = vmul.f32 %v313, %v330
        %v347 = vmul.f32 %v314, %v331
        %v348 = vmul.f32 %v315, %v332
        %v349 = vmul.f32 %v316, %v333
        %v350 = vadd.f32 %v334, %v342
        %v351 = vadd.f32 %v335, %v343
        %v352 = vadd.f32 %v336, %v344
        %v353 = vadd.f32 %v337, %v345
        %v354 = vadd.f32 %v338, %v346
        %v355 = vadd.f32 %v339, %v347
        %v356 = vadd.f32 %v340, %v348
        %v357 = vadd.f32 %v341, %v349
        %v358 = vadd.f32 %v350, %v352
        %v359 = vadd.f32 %v358, %v354
        %v360 = vadd.f32 %v359, %v356
        %v361 = vadd.f32 %v351, %v353
        %v362 = vadd.f32 %v361, %v355
        %v363 = vadd.f32 %v362, %v357
        %v364 = vmul.f32 %v309, %v317
        %v365 = vmul.f32 %v310, %v318
        %v366 = vmul.f32 %v311, %v319
        %v367 = vmul.f32 %v312, %v320
        %v368 = vmul.f32 %v313, %v321
        %v369 = vmul.f32 %v314, %v322
        %v370 = vmul.f32 %v315, %v323
        %v371 = vmul.f32 %v316, %v324
        %v372 = vmul.f32 %v300, %v326
        %v373 = vmul.f32 %v301, %v327
        %v374 = vmul.f32 %v302, %v328
        %v375 = vmul.f32 %v303, %v329
        %v376 = vmul.f32 %v304, %v330
        %v377 = vmul.f32 %v305, %v331
        %v378 = vmul.f32 %v306, %v332
        %v379 = vmul.f32 %v307, %v333
        %v380 = vsub.f32 %v364, %v372
        %v381 = vsub.f32 %v365, %v373
        %v382 = vsub.f32 %v366, %v374
        %v383 = vsub.f32 %v367, %v375
        %v384 = vsub.f32 %v368, %v376
        %v385 = vsub.f32 %v369, %v377
        %v386 = vsub.f32 %v370, %v378
        %v387 = vsub.f32 %v371, %v379
        %v388 = vadd.f32 %v380, %v382
        %v389 = vadd.f32 %v388, %v384
        %v390 = vadd.f32 %v389, %v386
        %v391 = vadd.f32 %v381, %v383
        %v392 = vadd.f32 %v391, %v385
        %v393 = vadd.f32 %v392, %v387
        %s394 = sld [smem:[#allocation2]]
        %v395 = vstv %s394
        %v396 = vmul.f32 %v395, %v360
        %v397 = vmul.f32 %v395, %v363
        %s398 = sld [smem:[#allocation2 + $0x1]]
        %v399 = vstv %s398
        %v400 = vmul.f32 %v399, %v390
        %v401 = vmul.f32 %v399, %v393
        %v402 = vadd.f32 %v396, %v400
        %v403 = vadd.f32 %v397, %v401
        %s404 = sld [smem:[#allocation4]]
        %v405 = vstv %s404
        %v406 = vadd.f32 %v402, %v405
        %v407 = vadd.f32 %v403, %v405
        %s408 = sld [smem:[#allocation2 + $0x80]]
        %v409 = vstv %s408
        %v410 = vmul.f32 %v409, %v360
        %v411 = vmul.f32 %v409, %v363
        %s412 = sld [smem:[#allocation2 + $0x81]]
        %v413 = vstv %s412
        %v414 = vmul.f32 %v413, %v390
        %v415 = vmul.f32 %v413, %v393
        %v416 = vadd.f32 %v410, %v414
        %v417 = vadd.f32 %v411, %v415
        %s418 = sld [smem:[#allocation4 + $0x1]]
        %v419 = vstv %s418
        %v420 = vadd.f32 %v416, %v419
        %v421 = vadd.f32 %v417, %v419
        %v422 = vmul.f32 %v406, %v317
        %v423 = vmul.f32 %v407, %v318
        %v424 = vmul.f32 %v406, %v319
        %v425 = vmul.f32 %v407, %v320
        %v426 = vmul.f32 %v406, %v321
        %v427 = vmul.f32 %v407, %v322
        %v428 = vmul.f32 %v406, %v323
        %v429 = vmul.f32 %v407, %v324
        %v430 = vmul.f32 %v420, %v326
        %v431 = vmul.f32 %v421, %v327
        %v432 = vmul.f32 %v420, %v328
        %v433 = vmul.f32 %v421, %v329
        %v434 = vmul.f32 %v420, %v330
        %v435 = vmul.f32 %v421, %v331
        %v436 = vmul.f32 %v420, %v332
        %v437 = vmul.f32 %v421, %v333
        %v438 = vsub.f32 %v422, %v430
        %v439 = vsub.f32 %v423, %v431
        %v440 = vsub.f32 %v424, %v432
        %v441 = vsub.f32 %v425, %v433
        %v442 = vsub.f32 %v426, %v434
        %v443 = vsub.f32 %v427, %v435
        %v444 = vsub.f32 %v428, %v436
        %v445 = vsub.f32 %v429, %v437
        %446 = vst [vmem:[%s298] sm:$0xff] %v438
        %447 = vst [vmem:[%s298 + $0x8] sm:$0xff] %v439
        %448 = vst [vmem:[%s298 + $0x10] sm:$0xff] %v440
        %449 = vst [vmem:[%s298 + $0x18] sm:$0xff] %v441
        %450 = vst [vmem:[%s298 + $0x20] sm:$0xff] %v442
        %451 = vst [vmem:[%s298 + $0x28] sm:$0xff] %v443
        %452 = vst [vmem:[%s298 + $0x30] sm:$0xff] %v444
        %453 = vst [vmem:[%s298 + $0x38] sm:$0xff] %v445
        %v454 = vmul.f32 %v406, %v326
        %v455 = vmul.f32 %v407, %v327
        %v456 = vmul.f32 %v406, %v328
        %v457 = vmul.f32 %v407, %v329
        %v458 = vmul.f32 %v406, %v330
        %v459 = vmul.f32 %v407, %v331
        %v460 = vmul.f32 %v406, %v332
        %v461 = vmul.f32 %v407, %v333
        %v462 = vmul.f32 %v420, %v317
        %v463 = vmul.f32 %v421, %v318
        %v464 = vmul.f32 %v420, %v319
        %v465 = vmul.f32 %v421, %v320
        %v466 = vmul.f32 %v420, %v321
        %v467 = vmul.f32 %v421, %v322
        %v468 = vmul.f32 %v420, %v323
        %v469 = vmul.f32 %v421, %v324
        %v470 = vadd.f32 %v454, %v462
        %v471 = vadd.f32 %v455, %v463
        %v472 = vadd.f32 %v456, %v464
        %v473 = vadd.f32 %v457, %v465
        %v474 = vadd.f32 %v458, %v466
        %v475 = vadd.f32 %v459, %v467
        %v476 = vadd.f32 %v460, %v468
        %v477 = vadd.f32 %v461, %v469
        %s478 = scalar_lea.vmem %s298, 64
        %479 = vst [vmem:[%s478] sm:$0xff] %v470
        %480 = vst [vmem:[%s478 + $0x8] sm:$0xff] %v471
        %481 = vst [vmem:[%s478 + $0x10] sm:$0xff] %v472
        %482 = vst [vmem:[%s478 + $0x18] sm:$0xff] %v473
        %483 = vst [vmem:[%s478 + $0x20] sm:$0xff] %v474
        %484 = vst [vmem:[%s478 + $0x28] sm:$0xff] %v475
        %485 = vst [vmem:[%s478 + $0x30] sm:$0xff] %v476
        %486 = vst [vmem:[%s478 + $0x38] sm:$0xff] %v477
        %s487 = smul.u32 2, %s22
        %p488 = scmp.lt.s32.totalorder %s21, 1
        %s489 = scalar_select %p488, %s21, 1
        %p490 = scmp.lt.s32.totalorder %s487, 1
        %s491 = scalar_select %p490, %s487, 1
        %s492 = smul.addr %s489, 16
        %s493 = sadd.s32 %s491, %s492
        %s494 = smul.addr %s493, 8
        %s495 = scalar_lea.vmem %s4, %s494
        // Predicated region
        $region45: #{varnet_block.2} parent=35 // pred_check
          %p496 = pneg %p147
        $region46: #{varnet_block.2} parent=35 // pred_check_branch
          %498 = sbr.rel (%p496) target = $region48
        $region47: #{varnet_block.2} parent=35 // pred_region
          %s499 = smul.u32 2, %s22
        $region48: #{varnet_block.2} parent=35 // pred_fallthru
          _
      $region36: #{varnet_block.2} parent=5 // pred_fallthru
        _
      %p500 = scmp.le.s32.totalorder 2, %s12
      // Predicated region
      $region49: #{varnet_block.2} parent=5 // pred_check
        %p501 = pneg %p500
      $region50: #{varnet_block.2} parent=5 // pred_check_branch
        %503 = sbr.rel (%p501) target = $region52
      $region51: #{varnet_block.2} parent=5 // pred_region
        %s504 = ssub.s32 %s12, 2
        // Predicated region
        $region53: #{varnet_block.2} parent=51 // pred_check
          %p505 = pneg %p153
        $region54: #{varnet_block.2} parent=51 // pred_check_branch
          %507 = sbr.rel (%p505) target = $region56
        $region55: #{varnet_block.2} parent=51 // pred_region
          %s508 = smul.u32 2, %s24
          %p509 = scmp.lt.s32.totalorder %s23, 1
          %s510 = scalar_select %p509, %s23, 1
          %p511 = scmp.lt.s32.totalorder %s508, 1
          %s512 = scalar_select %p511, %s508, 1
          %s513 = smul.addr %s510, 16
          %s514 = sadd.s32 %s512, %s513
          %s515 = smul.addr %s514, 8
          %s516 = scalar_lea.vmem %s4, %s515
        $region56: #{varnet_block.2} parent=51 // pred_fallthru
          _
      $region52: #{varnet_block.2} parent=5 // pred_fallthru
        _
    $region6: #{varnet_block.2} parent=1 // loop_footer
      %s16 = sadd.s32 1, %s12
    $region7: #{varnet_block.2} parent=1 // loop_footer_branch
      %11 = sbr.rel target = $region3
    $region8: #{varnet_block.2} parent=1 // loop_exit
      _
    %517 = vsyncpa [#allocation3], 1
    %s518 = scalar_lea.sflag [#allocation3], 1
    %519 = vsyncpa %s518, 1
    %520 = vsyncpa [#allocation5], 1

// kernel: varnet_block.3
$region0: #{varnet_block.3}
  #allocation0 [shape = 'u32[]', space=smem, size = 0x4, offset = 0x4, fixed_abs, tag = 'smem constant byte address 0x4 - core index']
  #allocation1 [shape = 'u32[144,128]{1,0:T(1,128)}', space=vmem, size = 0x12000, scoped, tag = 'internal scratch']
  %s0 = inlined_call_operand.vmem [shape: f32[2,2,4,16,128], index: 0, kind: input, shape index: {}]
  %s1 = inlined_call_operand.vmem [shape: f32[2,2,4,16,128], index: 1, kind: input, shape index: {}]
  %s2 = inlined_call_operand.vmem [shape: f32[2,2,4,16,128], index: 2, kind: input, shape index: {}]
  %s3 = inlined_call_operand.vmem [shape: f32[1,128], index: 3, kind: input, shape index: {}]
  %s4 = inlined_call_operand.vmem [shape: f32[2,2,4,16,128], index: 4, kind: output, shape index: {}]
  %s5 = sld [smem:[#allocation0]]
  $region49: #{varnet_block.3} parent=0
    _
  %s7 = ssub.s32 1, %s5
  %s8 = scalar_select 0, %s7, %s5
  loop: start=0, step=1, limit=4
  $region2: #{varnet_block.3} parent=0 // loop_pre_header
    _
  $region3: #{varnet_block.3} parent=0 // loop_header
    %s10 = sphi 0, %s14
    %p11 = scmp.ge.s32.totalorder %s10, 4
    %s17 = sphi 0, %s29
    %s18 = sphi 0, %s25
    %s19 = sphi 0, %s17
    %s20 = sphi 0, %s18
    %s21 = sphi 0, %s19
    %s22 = sphi 0, %s20
    %s34 = sphi 0, %s36
    %s37 = sphi 0, %s34
    %s38 = sphi 0, %s37
    %s54 = sphi 0, %s38
    %s62 = sphi 0, %s64
    %s65 = sphi 0, %s62
    %s66 = sphi 0, %s65
    %s82 = sphi 0, %s66
    %s90 = sphi 0, %s92
    %s93 = sphi 0, %s90
    %s94 = sphi 0, %s93
    %s110 = sphi 0, %s94
    %s114 = sphi 0, %s114
    %s116 = sphi 0, %s114
    %s117 = sphi 0, %s116
    %s131 = sphi 0, %s117
    %s139 = sphi 0, %s141
    %s142 = sphi 0, %s139
    %s143 = sphi 0, %s142
    %s159 = sphi 0, %s143
  $region4: #{varnet_block.3} parent=0 // loop_header_branch
    %13 = sbr.rel (%p11) target = $region8
  $region5: #{varnet_block.3} parent=0 // loop_body
    %s15 = ssub.s32 %s10, 1
    %s16 = ssub.s32 %s10, 2
    %s23 = sadd.s32 1, %s18
    %p24 = scmp.ge.s32.totalorder %s23, 1
    %s25 = scalar_select %p24, 0, %s23
    %s26 = sadd.s32 1, %s17
    %s27 = scalar_select %p24, %s26, %s17
    %p28 = scmp.ge.s32.totalorder %s27, 2
    %s29 = scalar_select %p28, 0, %s27
    %s30 = ssub.s32 %s17, %s29
    %s31 = ssub.s32 %s18, %s25
    %s32 = sor.u32 %s30, %s31
    %p33 = scmp.eq.s32.totalorder %s32, 0
    %s35 = sadd.s32 %s34, 1
    %s36 = scalar_select %p33, %s34, %s35
    %p39 = pneg %p33
    %p40 = scmp.eq.s32.totalorder %s10, 1
    %p41 = por %p39, %p40
    %p42 = scmp.ne.s32.totalorder %s34, %s37
    %p43 = scmp.eq.s32.totalorder %s10, 0
    %p44 = por %p42, %p43
    %p45 = scmp.ne.s32.totalorder %s34, %s37
    %p46 = scmp.eq.s32.totalorder %s15, 1
    %p47 = por %p45, %p46
    %p48 = scmp.ne.s32.totalorder %s37, %s38
    %p49 = scmp.eq.s32.totalorder %s15, 0
    %p50 = por %p48, %p49
    %p51 = scmp.ne.s32.totalorder %s37, %s38
    %p52 = scmp.eq.s32.totalorder %s16, 1
    %p53 = por %p51, %p52
    %p55 = scmp.ne.s32.totalorder %s38, %s54
    %p56 = scmp.eq.s32.totalorder %s16, 0
    %p57 = por %p55, %p56
    %s58 = ssub.s32 %s17, %s29
    %s59 = ssub.s32 %s18, %s25
    %s60 = sor.u32 %s58, %s59
    %p61 = scmp.eq.s32.totalorder %s60, 0
    %s63 = sadd.s32 %s62, 1
    %s64 = scalar_select %p61, %s62, %s63
    %p67 = pneg %p61
    %p68 = scmp.eq.s32.totalorder %s10, 1
    %p69 = por %p67, %p68
    %p70 = scmp.ne.s32.totalorder %s62, %s65
    %p71 = scmp.eq.s32.totalorder %s10, 0
    %p72 = por %p70, %p71
    %p73 = scmp.ne.s32.totalorder %s62, %s65
    %p74 = scmp.eq.s32.totalorder %s15, 1
    %p75 = por %p73, %p74
    %p76 = scmp.ne.s32.totalorder %s65, %s66
    %p77 = scmp.eq.s32.totalorder %s15, 0
    %p78 = por %p76, %p77
    %p79 = scmp.ne.s32.totalorder %s65, %s66
    %p80 = scmp.eq.s32.totalorder %s16, 1
    %p81 = por %p79, %p80
    %p83 = scmp.ne.s32.totalorder %s66, %s82
    %p84 = scmp.eq.s32.totalorder %s16, 0
    %p85 = por %p83, %p84
    %s86 = ssub.s32 %s17, %s29
    %s87 = ssub.s32 %s18, %s25
    %s88 = sor.u32 %s86, %s87
    %p89 = scmp.eq.s32.totalorder %s88, 0
    %s91 = sadd.s32 %s90, 1
    %s92 = scalar_select %p89, %s90, %s91
    %p95 = pneg %p89
    %p96 = scmp.eq.s32.totalorder %s10, 1
    %p97 = por %p95, %p96
    %p98 = scmp.ne.s32.totalorder %s90, %s93
    %p99 = scmp.eq.s32.totalorder %s10, 0
    %p100 = por %p98, %p99
    %p101 = scmp.ne.s32.totalorder %s90, %s93
    %p102 = scmp.eq.s32.totalorder %s15, 1
    %p103 = por %p101, %p102
    %p104 = scmp.ne.s32.totalorder %s93, %s94
    %p105 = scmp.eq.s32.totalorder %s15, 0
    %p106 = por %p104, %p105
    %p107 = scmp.ne.s32.totalorder %s93, %s94
    %p108 = scmp.eq.s32.totalorder %s16, 1
    %p109 = por %p107, %p108
    %p111 = scmp.ne.s32.totalorder %s94, %s110
    %p112 = scmp.eq.s32.totalorder %s16, 0
    %p113 = por %p111, %p112
    %s115 = sadd.s32 %s114, 1
    %p118 = scmp.eq.s32.totalorder %s10, 1
    %p119 = scmp.ne.s32.totalorder %s114, %s116
    %p120 = scmp.eq.s32.totalorder %s10, 0
    %p121 = por %p119, %p120
    %p122 = scmp.ne.s32.totalorder %s114, %s116
    %p123 = scmp.eq.s32.totalorder %s15, 1
    %p124 = por %p122, %p123
    %p125 = scmp.ne.s32.totalorder %s116, %s117
    %p126 = scmp.eq.s32.totalorder %s15, 0
    %p127 = por %p125, %p126
    %p128 = scmp.ne.s32.totalorder %s116, %s117
    %p129 = scmp.eq.s32.totalorder %s16, 1
    %p130 = por %p128, %p129
    %p132 = scmp.ne.s32.totalorder %s117, %s131
    %p133 = scmp.eq.s32.totalorder %s16, 0
    %p134 = por %p132, %p133
    %s135 = ssub.s32 %s17, %s29
    %s136 = ssub.s32 %s18, %s25
    %s137 = sor.u32 %s135, %s136
    %p138 = scmp.eq.s32.totalorder %s137, 0
    %s140 = sadd.s32 %s139, 1
    %s141 = scalar_select %p138, %s139, %s140
    %p144 = pneg %p138
    %p145 = scmp.eq.s32.totalorder %s10, 1
    %p146 = por %p144, %p145
    %p147 = scmp.ne.s32.totalorder %s139, %s142
    %p148 = scmp.eq.s32.totalorder %s10, 0
    %p149 = por %p147, %p148
    %p150 = scmp.ne.s32.totalorder %s139, %s142
    %p151 = scmp.eq.s32.totalorder %s15, 1
    %p152 = por %p150, %p151
    %p153 = scmp.ne.s32.totalorder %s142, %s143
    %p154 = scmp.eq.s32.totalorder %s15, 0
    %p155 = por %p153, %p154
    %p156 = scmp.ne.s32.totalorder %s142, %s143
    %p157 = scmp.eq.s32.totalorder %s16, 1
    %p158 = por %p156, %p157
    %p160 = scmp.ne.s32.totalorder %s143, %s159
    %p161 = scmp.eq.s32.totalorder %s16, 0
    %p162 = por %p160, %p161
    %p163 = scmp.le.s32.totalorder 1, %s10
    %p164 = scmp.lt.s32.totalorder %s10, 3
    %p165 = pnand %p163, %p164
    %p166 = pneg %p165
    // Predicated region
    $region9: #{varnet_block.3} parent=5 // pred_check
      _
    $region10: #{varnet_block.3} parent=5 // pred_check_branch
      %168 = sbr.rel (%p165) target = $region12
    $region11: #{varnet_block.3} parent=5 // pred_region
      %s169 = ssub.s32 %s10, 1
      // Predicated region
      $region13: #{varnet_block.3} parent=11 // pred_check
        %p170 = pneg %p127
      $region14: #{varnet_block.3} parent=11 // pred_check_branch
        %172 = sbr.rel (%p170) target = $region16
      $region15: #{varnet_block.3} parent=11 // pred_region
        _
      $region16: #{varnet_block.3} parent=11 // pred_fallthru
        _
    $region12: #{varnet_block.3} parent=5 // pred_fallthru
      _
    %p173 = scmp.lt.s32.totalorder %s10, 2
    // Predicated region
    $region17: #{varnet_block.3} parent=5 // pred_check
      %p174 = pneg %p173
    $region18: #{varnet_block.3} parent=5 // pred_check_branch
      %176 = sbr.rel (%p174) target = $region20
    $region19: #{varnet_block.3} parent=5 // pred_region
      // Predicated region
      $region21: #{varnet_block.3} parent=19 // pred_check
        %p177 = pneg %p44
      $region22: #{varnet_block.3} parent=19 // pred_check_branch
        %179 = sbr.rel (%p177) target = $region24
      $region23: #{varnet_block.3} parent=19 // pred_region
        %s180 = smul.u32 2, %s18
        %p181 = scmp.lt.s32.totalorder %s17, 1
        %s182 = scalar_select %p181, %s17, 1
        %p183 = scmp.lt.s32.totalorder %s180, 1
        %s184 = scalar_select %p183, %s180, 1
        %s185 = smul.addr %s182, 16
        %s186 = sadd.s32 %s184, %s185
        %s187 = smul.addr %s186, 8
        %s188 = scalar_lea.vmem %s0, %s187
        %s189 = smul.u32 2, %s18
      $region24: #{varnet_block.3} parent=19 // pred_fallthru
        _
      // Predicated region
      $region25: #{varnet_block.3} parent=19 // pred_check
        %p190 = pneg %p72
      $region26: #{varnet_block.3} parent=19 // pred_check_branch
        %192 = sbr.rel (%p190) target = $region28
      $region27: #{varnet_block.3} parent=19 // pred_region
        %s193 = smul.u32 2, %s18
        %p194 = scmp.lt.s32.totalorder %s17, 1
        %s195 = scalar_select %p194, %s17, 1
        %p196 = scmp.lt.s32.totalorder %s193, 1
        %s197 = scalar_select %p196, %s193, 1
        %s198 = smul.addr %s195, 16
        %s199 = sadd.s32 %s197, %s198
        %s200 = smul.addr %s199, 8
        %s201 = scalar_lea.vmem %s1, %s200
        %s202 = smul.u32 2, %s18
      $region28: #{varnet_block.3} parent=19 // pred_fallthru
        _
      // Predicated region
      $region29: #{varnet_block.3} parent=19 // pred_check
        %p203 = pneg %p100
      $region30: #{varnet_block.3} parent=19 // pred_check_branch
        %205 = sbr.rel (%p203) target = $region32
      $region31: #{varnet_block.3} parent=19 // pred_region
        %s206 = smul.u32 2, %s18
        %p207 = scmp.lt.s32.totalorder %s17, 1
        %s208 = scalar_select %p207, %s17, 1
        %p209 = scmp.lt.s32.totalorder %s206, 1
        %s210 = scalar_select %p209, %s206, 1
        %s211 = smul.addr %s208, 16
        %s212 = sadd.s32 %s210, %s211
        %s213 = smul.addr %s212, 8
        %s214 = scalar_lea.vmem %s2, %s213
        %s215 = smul.u32 2, %s18
      $region32: #{varnet_block.3} parent=19 // pred_fallthru
        _
    $region20: #{varnet_block.3} parent=5 // pred_fallthru
      _
    %p216 = scmp.le.s32.totalorder 1, %s10
    %p217 = scmp.lt.s32.totalorder %s10, 3
    %p218 = pnand %p216, %p217
    %p219 = pneg %p218
    // Predicated region
    $region33: #{varnet_block.3} parent=5 // pred_check
      _
    $region34: #{varnet_block.3} parent=5 // pred_check_branch
      %221 = sbr.rel (%p218) target = $region36
    $region35: #{varnet_block.3} parent=5 // pred_region
      %s222 = ssub.s32 %s10, 1
      %s223 = smul.u32 2, %s20
      %p224 = scmp.lt.s32.totalorder %s19, 1
      %s225 = scalar_select %p224, %s19, 1
      %p226 = scmp.lt.s32.totalorder %s223, 1
      %s227 = scalar_select %p226, %s223, 1
      %s228 = smul.addr %s225, 16
      %s229 = sadd.s32 %s227, %s228
      %s230 = smul.addr %s229, 8
      %s231 = scalar_lea.vmem %s0, %s230
      %p232 = pneg %p50
      %p233 = pneg %p47
      %s234 = smul.u32 2, %s20
      %p235 = scmp.lt.s32.totalorder %s19, 1
      %s236 = scalar_select %p235, %s19, 1
      %p237 = scmp.lt.s32.totalorder %s234, 1
      %s238 = scalar_select %p237, %s234, 1
      %s239 = smul.addr %s236, 16
      %s240 = sadd.s32 %s238, %s239
      %s241 = smul.addr %s240, 8
      %s242 = scalar_lea.vmem %s1, %s241
      %p243 = pneg %p78
      %p244 = pneg %p75
      %s245 = smul.u32 2, %s20
      %p246 = scmp.lt.s32.totalorder %s19, 1
      %s247 = scalar_select %p246, %s19, 1
      %p248 = scmp.lt.s32.totalorder %s245, 1
      %s249 = scalar_select %p248, %s245, 1
      %s250 = smul.addr %s247, 16
      %s251 = sadd.s32 %s249, %s250
      %s252 = smul.addr %s251, 8
      %s253 = scalar_lea.vmem %s2, %s252
      %p254 = pneg %p106
      %p255 = pneg %p103
      %p256 = pneg %p127
      %p257 = pneg %p124
      %p258 = pneg %p155
      %p259 = pneg %p152
      %s260 = smul.u32 2, %s20
      %p261 = scmp.lt.s32.totalorder %s19, 1
      %s262 = scalar_select %p261, %s19, 1
      %p263 = scmp.lt.s32.totalorder %s260, 1
      %s264 = scalar_select %p263, %s260, 1
      %s265 = smul.addr %s262, 16
      %s266 = sadd.s32 %s264, %s265
      %s267 = smul.addr %s266, 8
      %s268 = scalar_lea.vmem %s4, %s267
      %s269 = smul.u32 2, %s20
      %p270 = scmp.lt.s32.totalorder %s19, 1
      %s271 = scalar_select %p270, %s19, 1
      %p272 = scmp.lt.s32.totalorder %s269, 1
      %s273 = scalar_select %p272, %s269, 1
      %s274 = smul.addr %s271, 16
      %s275 = sadd.s32 %s273, %s274
      %s276 = smul.addr %s275, 8
      %s277 = scalar_lea.vmem %s0, %s276
      %s278 = smul.u32 2, %s20
      %s279 = smul.u32 2, %s20
      %p280 = scmp.lt.s32.totalorder %s19, 1
      %s281 = scalar_select %p280, %s19, 1
      %p282 = scmp.lt.s32.totalorder %s279, 1
      %s283 = scalar_select %p282, %s279, 1
      %s284 = smul.addr %s281, 16
      %s285 = sadd.s32 %s283, %s284
      %s286 = smul.addr %s285, 8
      %s287 = scalar_lea.vmem %s1, %s286
      %s288 = smul.u32 2, %s20
      %s289 = smul.u32 2, %s20
      %p290 = scmp.lt.s32.totalorder %s19, 1
      %s291 = scalar_select %p290, %s19, 1
      %p292 = scmp.lt.s32.totalorder %s289, 1
      %s293 = scalar_select %p292, %s289, 1
      %s294 = smul.addr %s291, 16
      %s295 = sadd.s32 %s293, %s294
      %s296 = smul.addr %s295, 8
      %s297 = scalar_lea.vmem %s2, %s296
      %s298 = smul.u32 2, %s20
      %s299 = smul.u32 2, %s20
      %p300 = scmp.lt.s32.totalorder %s19, 1
      %s301 = scalar_select %p300, %s19, 1
      %p302 = scmp.lt.s32.totalorder %s299, 1
      %s303 = scalar_select %p302, %s299, 1
      %s304 = smul.addr %s301, 16
      %s305 = sadd.s32 %s303, %s304
      %s306 = smul.addr %s305, 8
      %s307 = scalar_lea.vmem %s4, %s306
      %s308 = smul.u32 2, %s20
      %v309 = vld [vmem:[%s3] sm:$0x1]
      %v310 = vld [vmem:[%s277] sm:$0xff]
      %v311 = vld [vmem:[%s277 + $0x8] sm:$0xff]
      %v312 = vld [vmem:[%s277 + $0x10] sm:$0xff]
      %v313 = vld [vmem:[%s277 + $0x18] sm:$0xff]
      %v314 = vld [vmem:[%s277 + $0x20] sm:$0xff]
      %v315 = vld [vmem:[%s277 + $0x28] sm:$0xff]
      %v316 = vld [vmem:[%s277 + $0x30] sm:$0xff]
      %v317 = vld [vmem:[%s277 + $0x38] sm:$0xff]
      %v318 = vld [vmem:[%s277 + $0x40] sm:$0xff]
      %v319 = vld [vmem:[%s277 + $0x48] sm:$0xff]
      %v320 = vld [vmem:[%s277 + $0x50] sm:$0xff]
      %v321 = vld [vmem:[%s277 + $0x58] sm:$0xff]
      %v322 = vld [vmem:[%s277 + $0x60] sm:$0xff]
      %v323 = vld [vmem:[%s277 + $0x68] sm:$0xff]
      %v324 = vld [vmem:[%s277 + $0x70] sm:$0xff]
      %v325 = vld [vmem:[%s277 + $0x78] sm:$0xff]
      %v326 = vld [vmem:[%s287] sm:$0xff]
      %v327 = vld [vmem:[%s287 + $0x8] sm:$0xff]
      %v328 = vld [vmem:[%s287 + $0x10] sm:$0xff]
      %v329 = vld [vmem:[%s287 + $0x18] sm:$0xff]
      %v330 = vld [vmem:[%s287 + $0x20] sm:$0xff]
      %v331 = vld [vmem:[%s287 + $0x28] sm:$0xff]
      %v332 = vld [vmem:[%s287 + $0x30] sm:$0xff]
      %v333 = vld [vmem:[%s287 + $0x38] sm:$0xff]
      %v334 = vld [vmem:[%s287 + $0x40] sm:$0xff]
      %v335 = vld [vmem:[%s287 + $0x48] sm:$0xff]
      %v336 = vld [vmem:[%s287 + $0x50] sm:$0xff]
      %v337 = vld [vmem:[%s287 + $0x58] sm:$0xff]
      %v338 = vld [vmem:[%s287 + $0x60] sm:$0xff]
      %v339 = vld [vmem:[%s287 + $0x68] sm:$0xff]
      %v340 = vld [vmem:[%s287 + $0x70] sm:$0xff]
      %v341 = vld [vmem:[%s287 + $0x78] sm:$0xff]
      %v342 = vsub.f32 %v310, %v326
      %v343 = vsub.f32 %v311, %v327
      %v344 = vsub.f32 %v312, %v328
      %v345 = vsub.f32 %v313, %v329
      %v346 = vsub.f32 %v314, %v330
      %v347 = vsub.f32 %v315, %v331
      %v348 = vsub.f32 %v316, %v332
      %v349 = vsub.f32 %v317, %v333
      %v350 = vsub.f32 %v318, %v334
      %v351 = vsub.f32 %v319, %v335
      %v352 = vsub.f32 %v320, %v336
      %v353 = vsub.f32 %v321, %v337
      %v354 = vsub.f32 %v322, %v338
      %v355 = vsub.f32 %v323, %v339
      %v356 = vsub.f32 %v324, %v340
      %v357 = vsub.f32 %v325, %v341
      %v359 = vlaneseq
      %v360 = vshrl.u32 %v359, 7
      %v361 = vsub.s32 0, %v360
      %v362 = vrot.slane %v309, %v361
      %v364 = vmul.f32 %v342, %v362
      %v365 = vmul.f32 %v343, %v362
      %v366 = vmul.f32 %v344, %v362
      %v367 = vmul.f32 %v345, %v362
      %v368 = vmul.f32 %v346, %v362
      %v369 = vmul.f32 %v347, %v362
      %v370 = vmul.f32 %v348, %v362
      %v371 = vmul.f32 %v349, %v362
      %v372 = vmul.f32 %v350, %v362
      %v373 = vmul.f32 %v351, %v362
      %v374 = vmul.f32 %v352, %v362
      %v375 = vmul.f32 %v353, %v362
      %v376 = vmul.f32 %v354, %v362
      %v377 = vmul.f32 %v355, %v362
      %v378 = vmul.f32 %v356, %v362
      %v379 = vmul.f32 %v357, %v362
      %v380 = vsub.f32 %v310, %v364
      %v381 = vsub.f32 %v311, %v365
      %v382 = vsub.f32 %v312, %v366
      %v383 = vsub.f32 %v313, %v367
      %v384 = vsub.f32 %v314, %v368
      %v385 = vsub.f32 %v315, %v369
      %v386 = vsub.f32 %v316, %v370
      %v387 = vsub.f32 %v317, %v371
      %v388 = vsub.f32 %v318, %v372
      %v389 = vsub.f32 %v319, %v373
      %v390 = vsub.f32 %v320, %v374
      %v391 = vsub.f32 %v321, %v375
      %v392 = vsub.f32 %v322, %v376
      %v393 = vsub.f32 %v323, %v377
      %v394 = vsub.f32 %v324, %v378
      %v395 = vsub.f32 %v325, %v379
      %v396 = vld [vmem:[%s297] sm:$0xff]
      %v397 = vld [vmem:[%s297 + $0x8] sm:$0xff]
      %v398 = vld [vmem:[%s297 + $0x10] sm:$0xff]
      %v399 = vld [vmem:[%s297 + $0x18] sm:$0xff]
      %v400 = vld [vmem:[%s297 + $0x20] sm:$0xff]
      %v401 = vld [vmem:[%s297 + $0x28] sm:$0xff]
      %v402 = vld [vmem:[%s297 + $0x30] sm:$0xff]
      %v403 = vld [vmem:[%s297 + $0x38] sm:$0xff]
      %v404 = vld [vmem:[%s297 + $0x40] sm:$0xff]
      %v405 = vld [vmem:[%s297 + $0x48] sm:$0xff]
      %v406 = vld [vmem:[%s297 + $0x50] sm:$0xff]
      %v407 = vld [vmem:[%s297 + $0x58] sm:$0xff]
      %v408 = vld [vmem:[%s297 + $0x60] sm:$0xff]
      %v409 = vld [vmem:[%s297 + $0x68] sm:$0xff]
      %v410 = vld [vmem:[%s297 + $0x70] sm:$0xff]
      %v411 = vld [vmem:[%s297 + $0x78] sm:$0xff]
      %v412 = vsub.f32 %v380, %v396
      %v413 = vsub.f32 %v381, %v397
      %v414 = vsub.f32 %v382, %v398
      %v415 = vsub.f32 %v383, %v399
      %v416 = vsub.f32 %v384, %v400
      %v417 = vsub.f32 %v385, %v401
      %v418 = vsub.f32 %v386, %v402
      %v419 = vsub.f32 %v387, %v403
      %v420 = vsub.f32 %v388, %v404
      %v421 = vsub.f32 %v389, %v405
      %v422 = vsub.f32 %v390, %v406
      %v423 = vsub.f32 %v391, %v407
      %v424 = vsub.f32 %v392, %v408
      %v425 = vsub.f32 %v393, %v409
      %v426 = vsub.f32 %v394, %v410
      %v427 = vsub.f32 %v395, %v411
      %428 = vst [vmem:[%s307] sm:$0xff] %v412
      %429 = vst [vmem:[%s307 + $0x8] sm:$0xff] %v413
      %430 = vst [vmem:[%s307 + $0x10] sm:$0xff] %v414
      %431 = vst [vmem:[%s307 + $0x18] sm:$0xff] %v415
      %432 = vst [vmem:[%s307 + $0x20] sm:$0xff] %v416
      %433 = vst [vmem:[%s307 + $0x28] sm:$0xff] %v417
      %434 = vst [vmem:[%s307 + $0x30] sm:$0xff] %v418
      %435 = vst [vmem:[%s307 + $0x38] sm:$0xff] %v419
      %436 = vst [vmem:[%s307 + $0x40] sm:$0xff] %v420
      %437 = vst [vmem:[%s307 + $0x48] sm:$0xff] %v421
      %438 = vst [vmem:[%s307 + $0x50] sm:$0xff] %v422
      %439 = vst [vmem:[%s307 + $0x58] sm:$0xff] %v423
      %440 = vst [vmem:[%s307 + $0x60] sm:$0xff] %v424
      %441 = vst [vmem:[%s307 + $0x68] sm:$0xff] %v425
      %442 = vst [vmem:[%s307 + $0x70] sm:$0xff] %v426
      %443 = vst [vmem:[%s307 + $0x78] sm:$0xff] %v427
      %s444 = smul.u32 2, %s20
      %p445 = scmp.lt.s32.totalorder %s19, 1
      %s446 = scalar_select %p445, %s19, 1
      %p447 = scmp.lt.s32.totalorder %s444, 1
      %s448 = scalar_select %p447, %s444, 1
      %s449 = smul.addr %s446, 16
      %s450 = sadd.s32 %s448, %s449
      %s451 = smul.addr %s450, 8
      %s452 = scalar_lea.vmem %s4, %s451
      // Predicated region
      $region37: #{varnet_block.3} parent=35 // pred_check
        %p453 = pneg %p152
      $region38: #{varnet_block.3} parent=35 // pred_check_branch
        %455 = sbr.rel (%p453) target = $region40
      $region39: #{varnet_block.3} parent=35 // pred_region
        %s456 = smul.u32 2, %s20
      $region40: #{varnet_block.3} parent=35 // pred_fallthru
        _
    $region36: #{varnet_block.3} parent=5 // pred_fallthru
      _
    %p457 = scmp.le.s32.totalorder 2, %s10
    // Predicated region
    $region41: #{varnet_block.3} parent=5 // pred_check
      %p458 = pneg %p457
    $region42: #{varnet_block.3} parent=5 // pred_check_branch
      %460 = sbr.rel (%p458) target = $region44
    $region43: #{varnet_block.3} parent=5 // pred_region
      %s461 = ssub.s32 %s10, 2
      // Predicated region
      $region45: #{varnet_block.3} parent=43 // pred_check
        %p462 = pneg %p158
      $region46: #{varnet_block.3} parent=43 // pred_check_branch
        %464 = sbr.rel (%p462) target = $region48
      $region47: #{varnet_block.3} parent=43 // pred_region
        %s465 = smul.u32 2, %s22
        %p466 = scmp.lt.s32.totalorder %s21, 1
        %s467 = scalar_select %p466, %s21, 1
        %p468 = scmp.lt.s32.totalorder %s465, 1
        %s469 = scalar_select %p468, %s465, 1
        %s470 = smul.addr %s467, 16
        %s471 = sadd.s32 %s469, %s470
        %s472 = smul.addr %s471, 8
        %s473 = scalar_lea.vmem %s4, %s472
      $region48: #{varnet_block.3} parent=43 // pred_fallthru
        _
    $region44: #{varnet_block.3} parent=5 // pred_fallthru
      _
  $region6: #{varnet_block.3} parent=0 // loop_footer
    %s14 = sadd.s32 1, %s10
  $region7: #{varnet_block.3} parent=0 // loop_footer_branch
    %9 = sbr.rel target = $region3
  $region8: #{varnet_block.3} parent=0 // loop_exit
    _

</llo_original>
